<compile_context>
chip_gen: v7x
topology: tpu7x:2x2x1
jax: 0.10.0
libtpu: 0.0.40
codegen_flags: <defaults>
</compile_context>

<pallas_src>
import functools

import jax
import jax.numpy as jnp
from jax.experimental import pallas as pl
from jax.experimental.pallas import tpu as pltpu


def _round_up(x: int, m: int) -> int:
    return ((x + m - 1) // m) * m


def _loss_sum_kernel(pred_ref, tgt_ref, out_ref, acc_ref, *, loss_type: str):
    s = pl.program_id(1)

    @pl.when(s == 0)
    def _():
        acc_ref[...] = jnp.zeros_like(acc_ref)

    # Memory-bound kernel: the f32 upcast is hidden under the DMA and keeps
    # the squared term / accumulation exact for bf16 inputs.
    diff = pred_ref[...].astype(jnp.float32) - tgt_ref[...].astype(jnp.float32)
    if loss_type == "l1":
        elem = jnp.abs(diff)
    else:  # 'mse' / 'l2'
        elem = diff * diff

    # Sublane-only reduce (lanes preserved) into the VMEM vector accumulator.
    acc_ref[...] += jnp.sum(elem, axis=0, keepdims=True)

    @pl.when(s == pl.num_programs(1) - 1)
    def _():
        total = jnp.sum(acc_ref[...])          # single cross-lane reduce per part
        out_ref[...] = jnp.broadcast_to(total, out_ref.shape)


def downsampled_loss(pred, target, down_factor: int = 1, *,
                     loss_type: str = "l1",
                     lane_width: int = 1024,
                     tile_rows: int = 512,
                     num_parts: int = 2):
    """Pallas implementation of DownsampledLoss.forward (mean reduction)."""
    assert pred.shape == target.shape
    assert loss_type in ("l1", "l2", "mse")

    # Strided spatial downsample on dims 1 and 2 (same as the PyTorch module).
    # TODO(synk): could be fused into the kernel's index_map (DMA only kept
    # rows) instead of an XLA strided slice in the wrapper.
    if down_factor > 1:
        assert pred.ndim >= 3, "down_factor > 1 requires at least 3D inputs"
        each_x = 2 ** (down_factor - 1)
        pred = pred[:, ::each_x, ::each_x]
        target = target[:, ::each_x, ::each_x]

    n = pred.size                              # true element count (mean denominator)
    lanes = lane_width
    rows = pl.cdiv(n, lanes)
    tm = _round_up(max(8, min(tile_rows, _round_up(rows, 8))), 8)
    padded_rows = _round_up(rows, tm * num_parts)
    padded_n = padded_rows * lanes
    steps_per_part = padded_rows // (tm * num_parts)

    def to_slab(x):
        flat = jnp.pad(x.reshape(-1), (0, padded_n - n))   # zeros: contribute 0
        return flat.reshape(padded_rows, lanes)

    pred2 = to_slab(pred)
    tgt2 = to_slab(target)
    itemsize = jnp.dtype(pred2.dtype).itemsize

    kernel = functools.partial(_loss_sum_kernel, loss_type=loss_type)

    partials = pl.pallas_call(
        kernel,
        out_shape=jax.ShapeDtypeStruct((num_parts, 1, 128), jnp.float32),
        grid_spec=pltpu.PrefetchScalarGridSpec(
            num_scalar_prefetch=0,
            grid=(num_parts, steps_per_part),
            in_specs=[
                pl.BlockSpec((tm, lanes),
                             lambda p, s: (p * steps_per_part + s, 0)),
                pl.BlockSpec((tm, lanes),
                             lambda p, s: (p * steps_per_part + s, 0)),
            ],
            out_specs=pl.BlockSpec((1, 1, 128), lambda p, s: (p, 0, 0)),
            scratch_shapes=[pltpu.VMEM((1, lanes), jnp.float32)],
        ),
        compiler_params=pltpu.CompilerParams(
            dimension_semantics=("parallel", "arbitrary")),
        cost_estimate=pl.CostEstimate(
            flops=3 * padded_n,
            transcendentals=0,
            bytes_accessed=2 * padded_n * itemsize + num_parts * 128 * 4),
    )(pred2, tgt2)

    # Sum the per-part partial sums and apply the 'mean' denominator
    # (true element count; padding contributed exactly zero).
    return jnp.sum(partials[:, 0, 0]) / jnp.float32(n)


def _reference(pred, target, down_factor=1, loss_type="l1"):
    if down_factor > 1:
        each_x = 2 ** (down_factor - 1)
        pred = pred[:, ::each_x, ::each_x]
        target = target[:, ::each_x, ::each_x]
    diff = pred.astype(jnp.float32) - target.astype(jnp.float32)
    if loss_type == "l1":
        return jnp.mean(jnp.abs(diff))
    return jnp.mean(diff * diff)


if __name__ == "__main__":
    key = jax.random.PRNGKey(0)
    kp, kt = jax.random.split(key)
    # (B, H, W, C) channel-last, small shapes; dims 1,2 are the strided dims.
    pred = jax.random.normal(kp, (2, 16, 16, 4), dtype=jnp.float32)
    target = jax.random.normal(kt, (2, 16, 16, 4), dtype=jnp.float32)

    for lt, df in (("l1", 1), ("mse", 1), ("l1", 2), ("mse", 3)):
        out = jax.block_until_ready(
            downsampled_loss(pred, target, down_factor=df, loss_type=lt))
        ref = _reference(pred, target, down_factor=df, loss_type=lt)
        assert jnp.allclose(out, ref, rtol=1e-5, atol=1e-6), (lt, df, out, ref)

    print("KERNEL_OK")
</pallas_src>

<mosaic_0001>
module attributes {stable_mosaic.version = 11 : i64} {
  func.func @_loss_sum_kernel(%arg0: i32, %arg1: i32, %arg2: memref<8x1024xf32, #tpu.memory_space<vmem>>, %arg3: memref<8x1024xf32, #tpu.memory_space<vmem>>, %arg4: memref<1x1x128xf32, #tpu.memory_space<vmem>>, %arg5: memref<1x1024xf32, #tpu.memory_space<vmem>>) attributes {dimension_semantics = [#tpu.dimension_semantics<parallel>, #tpu.dimension_semantics<arbitrary>], iteration_bounds = array<i64: 2, 1>, scalar_prefetch = 0 : i64, scratch_operands = 1 : i64, tpu.core_type = #tpu.core_type<tc>, window_params = [{transform_indices = @transform_0, window_bounds = array<i64: 8, 1024>}, {transform_indices = @transform_1, window_bounds = array<i64: 8, 1024>}, {transform_indices = @transform_2, window_bounds = array<i64: 1, 1, 128>}]} {
    %c0_i32 = arith.constant 0 : i32
    %0 = arith.cmpi eq, %arg1, %c0_i32 : i32
    %1 = arith.extui %0 : i1 to i32
    %c0_i32_0 = arith.constant 0 : i32
    %2 = arith.cmpi ne, %1, %c0_i32_0 : i32
    scf.if %2 {
      %cst_10 = arith.constant 0.000000e+00 : f32
      %15 = vector.broadcast %cst_10 : f32 to vector<1x1024xf32>
      %c0_11 = arith.constant 0 : index
      %c0_12 = arith.constant 0 : index
      %16 = vector.load %arg5[%c0_11, %c0_12] : memref<1x1024xf32, #tpu.memory_space<vmem>>, vector<1x1024xf32>
      tpu.vector_store %arg5[%c0_11, %c0_12], %15 {strides = array<i32>} : memref<1x1024xf32, #tpu.memory_space<vmem>>, vector<1x1024xf32>,
    } else {
    }
    %c0 = arith.constant 0 : index
    %c0_1 = arith.constant 0 : index
    %3 = vector.load %arg2[%c0, %c0_1] : memref<8x1024xf32, #tpu.memory_space<vmem>>, vector<8x1024xf32>
    %c0_2 = arith.constant 0 : index
    %c0_3 = arith.constant 0 : index
    %4 = vector.load %arg3[%c0_2, %c0_3] : memref<8x1024xf32, #tpu.memory_space<vmem>>, vector<8x1024xf32>
    %5 = arith.subf %3, %4 : vector<8x1024xf32>
    %6 = math.absf %5 : vector<8x1024xf32>
    %c0_4 = arith.constant 0 : index
    %c0_5 = arith.constant 0 : index
    %7 = vector.load %arg5[%c0_4, %c0_5] : memref<1x1024xf32, #tpu.memory_space<vmem>>, vector<1x1024xf32>
    %cst = arith.constant dense<0.000000e+00> : vector<1024xf32>
    %8 = vector.multi_reduction <add>, %6, %cst [0] : vector<8x1024xf32> to vector<1024xf32>
    %9 = vector.shape_cast %8 : vector<1024xf32> to vector<1x1024xf32>
    %10 = arith.addf %7, %9 : vector<1x1024xf32>
    %c0_6 = arith.constant 0 : index
    %c0_7 = arith.constant 0 : index
    %11 = vector.load %arg5[%c0_6, %c0_7] : memref<1x1024xf32, #tpu.memory_space<vmem>>, vector<1x1024xf32>
    tpu.vector_store %arg5[%c0_6, %c0_7], %10 {strides = array<i32>} : memref<1x1024xf32, #tpu.memory_space<vmem>>, vector<1x1024xf32>,
    %c0_i32_8 = arith.constant 0 : i32
    %12 = arith.cmpi eq, %arg1, %c0_i32_8 : i32
    %13 = arith.extui %12 : i1 to i32
    %c0_i32_9 = arith.constant 0 : i32
    %14 = arith.cmpi ne, %13, %c0_i32_9 : i32
    scf.if %14 {
      %c0_10 = arith.constant 0 : index
      %c0_11 = arith.constant 0 : index
      %15 = vector.load %arg5[%c0_10, %c0_11] : memref<1x1024xf32, #tpu.memory_space<vmem>>, vector<1x1024xf32>
      %16 = vector.shape_cast %15 : vector<1x1024xf32> to vector<1x1x1024xf32>
      %cst_12 = arith.constant dense<0.000000e+00> : vector<1xf32>
      %17 = vector.multi_reduction <add>, %16, %cst_12 [1, 2] : vector<1x1x1024xf32> to vector<1xf32>
      %18 = vector.shape_cast %17 : vector<1xf32> to vector<1x1x1xf32>
      %19 = vector.extract %18[0, 0, 0] : f32 from vector<1x1x1xf32>
      %20 = vector.broadcast %19 : f32 to vector<1x1x128xf32>
      %c0_13 = arith.constant 0 : index
      %c0_14 = arith.constant 0 : index
      %c0_15 = arith.constant 0 : index
      %21 = vector.load %arg4[%c0_13, %c0_14, %c0_15] : memref<1x1x128xf32, #tpu.memory_space<vmem>>, vector<1x1x128xf32>
      tpu.vector_store %arg4[%c0_13, %c0_14, %c0_15], %20 {strides = array<i32>} : memref<1x1x128xf32, #tpu.memory_space<vmem>>, vector<1x1x128xf32>,
    } else {
    }
    return
  }
  func.func @transform_0(%arg0: i32, %arg1: i32) -> (i32, i32) {
    %c1_i32 = arith.constant 1 : i32
    %0 = arith.muli %arg0, %c1_i32 : i32
    %1 = arith.addi %0, %arg1 : i32
    %c0_i32 = arith.constant 0 : i32
    %c0_i32_0 = arith.constant 0 : i32
    return %1, %c0_i32 : i32, i32
  }
  func.func @transform_1(%arg0: i32, %arg1: i32) -> (i32, i32) {
    %c1_i32 = arith.constant 1 : i32
    %0 = arith.muli %arg0, %c1_i32 : i32
    %1 = arith.addi %0, %arg1 : i32
    %c0_i32 = arith.constant 0 : i32
    %c0_i32_0 = arith.constant 0 : i32
    return %1, %c0_i32 : i32, i32
  }
  func.func @transform_2(%arg0: i32, %arg1: i32) -> (i32, i32, i32) {
    %c0_i32 = arith.constant 0 : i32
    %c0_i32_0 = arith.constant 0 : i32
    %c0_i32_1 = arith.constant 0 : i32
    return %arg0, %c0_i32, %c0_i32_0 : i32, i32, i32
  }
}

</mosaic_0001>

<llo_original>
// kernel: tpu_custom_call.1
$region0: #{tpu_custom_call.1}
  #allocation0 [shape = 'u32[]', space=smem, size = 0x4, offset = 0x4, fixed_abs, tag = 'smem constant byte address 0x4 - core index']
  #allocation1 [shape = 'u32[144,128]{1,0:T(1,128)}', space=vmem, size = 0x12000, scoped, tag = 'internal scratch']
  #allocation2 [shape = 'f32[1,1024]{1,0:T(1,128)}', space=vmem, size = 0x1000, scoped, tag = 'scratch operand']
  %s0 = inlined_call_operand.hbm [shape: f32[16,1024], index: 0, kind: input, shape index: {}]
  %s1 = inlined_call_operand.hbm [shape: f32[16,1024], index: 1, kind: input, shape index: {}]
  %s2 = inlined_call_operand.hbm [shape: f32[2,1,128], index: 2, kind: output, shape index: {}]
  %s3 = sld [smem:[#allocation0]]
  $region57: #{tpu_custom_call.1} parent=0
    _
  %s5 = ssub.s32 1, %s3
  %s6 = scalar_select 0, %s5, %s3
  $region1: #{tpu_custom_call.1} parent=0
    #allocation3 [shape = 'u8[65536]{0}', space=vmem, size = 0x10000, scoped, tag = 'input window, operand 0']
    #allocation4 [shape = 's32[2]{0}', space=sflag, size = 0x8, scoped, tag = 'scoped memory for tpu_custom_call.1']
    #allocation5 [shape = 's32[2]{0}', space=sflag, size = 0x8, scoped, tag = 'scoped memory for tpu_custom_call.1']
    #allocation6 [shape = 'u8[65536]{0}', space=vmem, size = 0x10000, scoped, tag = 'input window, operand 1']
    #allocation7 [shape = 's32[2]{0}', space=sflag, size = 0x8, scoped, tag = 'scoped memory for tpu_custom_call.1']
    #allocation8 [shape = 'u8[1024]{0}', space=vmem, size = 0x400, scoped, tag = 'output window, operand 0']
    %7 = vsyncpa [#allocation4], 0
    %s8 = scalar_lea.sflag [#allocation4], 1
    %9 = vsyncpa %s8, 0
    %10 = vsyncpa [#allocation7], 0
    %s11 = scalar_lea.sflag [#allocation7], 1
    %12 = vsyncpa %s11, 0
    %13 = vsyncpa [#allocation5], 0
    %s14 = scalar_lea.sflag [#allocation5], 1
    %15 = vsyncpa %s14, 0
    loop: start=0, step=1, limit=4
    $region2: #{tpu_custom_call.1} parent=1 // loop_pre_header
      _
    $region3: #{tpu_custom_call.1} parent=1 // loop_header
      %s17 = sphi 0, %s21
      %p18 = scmp.ge.s32.totalorder %s17, 4
      %s24 = sphi 0, %s36
      %s25 = sphi 0, %s32
      %s26 = sphi 0, %s24
      %s27 = sphi 0, %s25
      %s28 = sphi 0, %s26
      %s29 = sphi 0, %s27
      %s41 = sphi 0, %s43
      %s44 = sphi 0, %s41
      %s45 = sphi 0, %s44
      %s61 = sphi 0, %s45
      %s69 = sphi 0, %s71
      %s72 = sphi 0, %s69
      %s73 = sphi 0, %s72
      %s89 = sphi 0, %s73
      %s95 = sphi 0, %s97
      %s98 = sphi 0, %s95
      %s99 = sphi 0, %s98
      %s115 = sphi 0, %s99
    $region4: #{tpu_custom_call.1} parent=1 // loop_header_branch
      %20 = sbr.rel (%p18) target = $region8
    $region5: #{tpu_custom_call.1} parent=1 // loop_body
      %s22 = ssub.s32 %s17, 1
      %s23 = ssub.s32 %s17, 2
      %s30 = sadd.s32 1, %s25
      %p31 = scmp.ge.s32.totalorder %s30, 1
      %s32 = scalar_select %p31, 0, %s30
      %s33 = sadd.s32 1, %s24
      %s34 = scalar_select %p31, %s33, %s24
      %p35 = scmp.ge.s32.totalorder %s34, 2
      %s36 = scalar_select %p35, 0, %s34
      %s37 = sadd.s32 %s24, %s25
      %s38 = sadd.s32 %s36, %s32
      %s39 = ssub.s32 %s37, %s38
      %p40 = scmp.eq.s32.totalorder %s39, 0
      %s42 = sadd.s32 %s41, 1
      %s43 = scalar_select %p40, %s41, %s42
      %p46 = pneg %p40
      %p47 = scmp.eq.s32.totalorder %s17, 1
      %p48 = por %p46, %p47
      %p49 = scmp.ne.s32.totalorder %s41, %s44
      %p50 = scmp.eq.s32.totalorder %s17, 0
      %p51 = por %p49, %p50
      %p52 = scmp.ne.s32.totalorder %s41, %s44
      %p53 = scmp.eq.s32.totalorder %s22, 1
      %p54 = por %p52, %p53
      %p55 = scmp.ne.s32.totalorder %s44, %s45
      %p56 = scmp.eq.s32.totalorder %s22, 0
      %p57 = por %p55, %p56
      %p58 = scmp.ne.s32.totalorder %s44, %s45
      %p59 = scmp.eq.s32.totalorder %s23, 1
      %p60 = por %p58, %p59
      %p62 = scmp.ne.s32.totalorder %s45, %s61
      %p63 = scmp.eq.s32.totalorder %s23, 0
      %p64 = por %p62, %p63
      %s65 = sadd.s32 %s24, %s25
      %s66 = sadd.s32 %s36, %s32
      %s67 = ssub.s32 %s65, %s66
      %p68 = scmp.eq.s32.totalorder %s67, 0
      %s70 = sadd.s32 %s69, 1
      %s71 = scalar_select %p68, %s69, %s70
      %p74 = pneg %p68
      %p75 = scmp.eq.s32.totalorder %s17, 1
      %p76 = por %p74, %p75
      %p77 = scmp.ne.s32.totalorder %s69, %s72
      %p78 = scmp.eq.s32.totalorder %s17, 0
      %p79 = por %p77, %p78
      %p80 = scmp.ne.s32.totalorder %s69, %s72
      %p81 = scmp.eq.s32.totalorder %s22, 1
      %p82 = por %p80, %p81
      %p83 = scmp.ne.s32.totalorder %s72, %s73
      %p84 = scmp.eq.s32.totalorder %s22, 0
      %p85 = por %p83, %p84
      %p86 = scmp.ne.s32.totalorder %s72, %s73
      %p87 = scmp.eq.s32.totalorder %s23, 1
      %p88 = por %p86, %p87
      %p90 = scmp.ne.s32.totalorder %s73, %s89
      %p91 = scmp.eq.s32.totalorder %s23, 0
      %p92 = por %p90, %p91
      %s93 = ssub.s32 %s24, %s36
      %p94 = scmp.eq.s32.totalorder %s93, 0
      %s96 = sadd.s32 %s95, 1
      %s97 = scalar_select %p94, %s95, %s96
      %p100 = pneg %p94
      %p101 = scmp.eq.s32.totalorder %s17, 1
      %p102 = por %p100, %p101
      %p103 = scmp.ne.s32.totalorder %s95, %s98
      %p104 = scmp.eq.s32.totalorder %s17, 0
      %p105 = por %p103, %p104
      %p106 = scmp.ne.s32.totalorder %s95, %s98
      %p107 = scmp.eq.s32.totalorder %s22, 1
      %p108 = por %p106, %p107
      %p109 = scmp.ne.s32.totalorder %s98, %s99
      %p110 = scmp.eq.s32.totalorder %s22, 0
      %p111 = por %p109, %p110
      %p112 = scmp.ne.s32.totalorder %s98, %s99
      %p113 = scmp.eq.s32.totalorder %s23, 1
      %p114 = por %p112, %p113
      %p116 = scmp.ne.s32.totalorder %s99, %s115
      %p117 = scmp.eq.s32.totalorder %s23, 0
      %p118 = por %p116, %p117
      %p119 = scmp.le.s32.totalorder 1, %s17
      %p120 = scmp.lt.s32.totalorder %s17, 3
      %p121 = pnand %p119, %p120
      %p122 = pneg %p121
      // Predicated region
      $region9: #{tpu_custom_call.1} parent=5 // pred_check
        _
      $region10: #{tpu_custom_call.1} parent=5 // pred_check_branch
        %124 = sbr.rel (%p121) target = $region12
      $region11: #{tpu_custom_call.1} parent=5 // pred_region
        %s125 = ssub.s32 %s17, 1
      $region12: #{tpu_custom_call.1} parent=5 // pred_fallthru
        _
      %p126 = scmp.lt.s32.totalorder %s17, 2
      // Predicated region
      $region13: #{tpu_custom_call.1} parent=5 // pred_check
        %p127 = pneg %p126
      $region14: #{tpu_custom_call.1} parent=5 // pred_check_branch
        %129 = sbr.rel (%p127) target = $region16
      $region15: #{tpu_custom_call.1} parent=5 // pred_region
        // Predicated region
        $region17: #{tpu_custom_call.1} parent=15 // pred_check
          %p130 = pneg %p51
        $region18: #{tpu_custom_call.1} parent=15 // pred_check_branch
          %132 = sbr.rel (%p130) target = $region20
        $region19: #{tpu_custom_call.1} parent=15 // pred_region
          %s133 = sand.u32 %s41, 1
          %s134 = scalar_lea.sflag [#allocation4], %s133
          %s135 = sand.u32 %s41, 1
          %s136 = smul.addr %s135, 64
          %s137 = scalar_lea.vmem [#allocation3], %s136
          %s138 = sadd.s32 %s24, %s25
          %s140 = ssub.s32 1024, 1024
          %141 = vsyncadd %s134, %s140
          %s142 = smul.addr %s138, 8
          %s143 = smul.addr %s142, 128
          %s144 = scalar_lea.hbm %s0, %s143
          %s146 = sshll.u32 %s137, 4
          %s147 = int_to_ptr.vmem [resolvable:$true] %s146
          %149 = dma.hbm_to_vmem [thread:$0]  %s144, 1024, %s147, %s134
        $region20: #{tpu_custom_call.1} parent=15 // pred_fallthru
          _
        // Predicated region
        $region21: #{tpu_custom_call.1} parent=15 // pred_check
          %p150 = pneg %p79
        $region22: #{tpu_custom_call.1} parent=15 // pred_check_branch
          %152 = sbr.rel (%p150) target = $region24
        $region23: #{tpu_custom_call.1} parent=15 // pred_region
          %s153 = sand.u32 %s69, 1
          %s154 = scalar_lea.sflag [#allocation7], %s153
          %s155 = sand.u32 %s69, 1
          %s156 = smul.addr %s155, 64
          %s157 = scalar_lea.vmem [#allocation6], %s156
          %s158 = sadd.s32 %s24, %s25
          %s160 = ssub.s32 1024, 1024
          %161 = vsyncadd %s154, %s160
          %s162 = smul.addr %s158, 8
          %s163 = smul.addr %s162, 128
          %s164 = scalar_lea.hbm %s1, %s163
          %s166 = sshll.u32 %s157, 4
          %s167 = int_to_ptr.vmem [resolvable:$true] %s166
          %169 = dma.hbm_to_vmem [thread:$0]  %s164, 1024, %s167, %s154
        $region24: #{tpu_custom_call.1} parent=15 // pred_fallthru
          _
      $region16: #{tpu_custom_call.1} parent=5 // pred_fallthru
        _
      %p170 = scmp.le.s32.totalorder 1, %s17
      %p171 = scmp.lt.s32.totalorder %s17, 3
      %p172 = pnand %p170, %p171
      %p173 = pneg %p172
      // Predicated region
      $region25: #{tpu_custom_call.1} parent=5 // pred_check
        _
      $region26: #{tpu_custom_call.1} parent=5 // pred_check_branch
        %175 = sbr.rel (%p172) target = $region28
      $region27: #{tpu_custom_call.1} parent=5 // pred_region
        %s176 = ssub.s32 %s17, 1
        %s177 = sand.u32 %s44, 1
        %s178 = scalar_lea.sflag [#allocation4], %s177
        %s179 = sand.u32 %s44, 1
        %s180 = smul.addr %s179, 64
        %s181 = scalar_lea.vmem [#allocation3], %s180
        // Predicated region
        $region29: #{tpu_custom_call.1} parent=27 // pred_check
          %p182 = pneg %p57
        $region30: #{tpu_custom_call.1} parent=27 // pred_check_branch
          %184 = sbr.rel (%p182) target = $region32
        $region31: #{tpu_custom_call.1} parent=27 // pred_region
          %185 = dma.done %s178, 1024
        $region32: #{tpu_custom_call.1} parent=27 // pred_fallthru
          _
        %s186 = sand.u32 %s72, 1
        %s187 = scalar_lea.sflag [#allocation7], %s186
        %s188 = sand.u32 %s72, 1
        %s189 = smul.addr %s188, 64
        %s190 = scalar_lea.vmem [#allocation6], %s189
        // Predicated region
        $region33: #{tpu_custom_call.1} parent=27 // pred_check
          %p191 = pneg %p85
        $region34: #{tpu_custom_call.1} parent=27 // pred_check_branch
          %193 = sbr.rel (%p191) target = $region36
        $region35: #{tpu_custom_call.1} parent=27 // pred_region
          %194 = dma.done %s187, 1024
        $region36: #{tpu_custom_call.1} parent=27 // pred_fallthru
          _
        %s195 = sand.u32 %s44, 1
        %s196 = scalar_lea.sflag [#allocation4], %s195
        %s197 = sand.u32 %s44, 1
        %s198 = smul.addr %s197, 64
        %s199 = scalar_lea.vmem [#allocation3], %s198
        %p200 = pneg %p57
        %p201 = pneg %p54
        %s202 = sand.u32 %s72, 1
        %s203 = scalar_lea.sflag [#allocation7], %s202
        %s204 = sand.u32 %s72, 1
        %s205 = smul.addr %s204, 64
        %s206 = scalar_lea.vmem [#allocation6], %s205
        %p207 = pneg %p85
        %p208 = pneg %p82
        %p209 = pneg %p111
        %p210 = pneg %p108
        %s211 = sand.u32 %s98, 1
        %s212 = scalar_lea.sflag [#allocation5], %s211
        %s213 = sand.u32 %s98, 1
        %s214 = scalar_lea.vmem [#allocation8], %s213
        %s215 = sadd.s32 %s26, %s27
        %s216 = sadd.s32 %s26, %s27
        %p217 = scmp.eq.s32.totalorder %s27, 0
        // Predicated region
        $region37: #{tpu_custom_call.1} parent=27 // pred_check
          %p218 = pneg %p217
        $region38: #{tpu_custom_call.1} parent=27 // pred_check_branch
          %220 = sbr.rel (%p218) target = $region40
        $region39: #{tpu_custom_call.1} parent=27 // pred_region
          %221 = vst [vmem:[#allocation2] sm:$0xff] 0.0
        $region40: #{tpu_custom_call.1} parent=27 // pred_fallthru
          _
        %v222 = vld [vmem:[%s181] sm:$0xff]
        %v223 = vld [vmem:[%s181 + $0x8] sm:$0xff]
        %v224 = vld [vmem:[%s181 + $0x10] sm:$0xff]
        %v225 = vld [vmem:[%s181 + $0x18] sm:$0xff]
        %v226 = vld [vmem:[%s181 + $0x20] sm:$0xff]
        %v227 = vld [vmem:[%s181 + $0x28] sm:$0xff]
        %v228 = vld [vmem:[%s181 + $0x30] sm:$0xff]
        %v229 = vld [vmem:[%s181 + $0x38] sm:$0xff]
        %v230 = vld [vmem:[%s190] sm:$0xff]
        %v231 = vld [vmem:[%s190 + $0x8] sm:$0xff]
        %v232 = vld [vmem:[%s190 + $0x10] sm:$0xff]
        %v233 = vld [vmem:[%s190 + $0x18] sm:$0xff]
        %v234 = vld [vmem:[%s190 + $0x20] sm:$0xff]
        %v235 = vld [vmem:[%s190 + $0x28] sm:$0xff]
        %v236 = vld [vmem:[%s190 + $0x30] sm:$0xff]
        %v237 = vld [vmem:[%s190 + $0x38] sm:$0xff]
        %v238 = vsub.f32 %v222, %v230
        %v239 = vsub.f32 %v223, %v231
        %v240 = vsub.f32 %v224, %v232
        %v241 = vsub.f32 %v225, %v233
        %v242 = vsub.f32 %v226, %v234
        %v243 = vsub.f32 %v227, %v235
        %v244 = vsub.f32 %v228, %v236
        %v245 = vsub.f32 %v229, %v237
        %v246 = vand.u32 2147483647, %v238
        %v247 = vand.u32 2147483647, %v239
        %v248 = vand.u32 2147483647, %v240
        %v249 = vand.u32 2147483647, %v241
        %v250 = vand.u32 2147483647, %v242
        %v251 = vand.u32 2147483647, %v243
        %v252 = vand.u32 2147483647, %v244
        %v253 = vand.u32 2147483647, %v245
        %v254 = vld [vmem:[#allocation2] sm:$0xff]
        %v255 = vrot.slane %v246, 4
        %v256 = vadd.f32 %v246, %v255
        %v257 = vrot.slane %v256, 2
        %v258 = vadd.f32 %v256, %v257
        %v259 = vrot.slane %v258, 1
        %v260 = vadd.f32 %v258, %v259
        %v261 = vrot.slane %v247, 4
        %v262 = vadd.f32 %v247, %v261
        %v263 = vrot.slane %v262, 2
        %v264 = vadd.f32 %v262, %v263
        %v265 = vrot.slane %v264, 1
        %v266 = vadd.f32 %v264, %v265
        %v267 = vrot.slane %v248, 4
        %v268 = vadd.f32 %v248, %v267
        %v269 = vrot.slane %v268, 2
        %v270 = vadd.f32 %v268, %v269
        %v271 = vrot.slane %v270, 1
        %v272 = vadd.f32 %v270, %v271
        %v273 = vrot.slane %v249, 4
        %v274 = vadd.f32 %v249, %v273
        %v275 = vrot.slane %v274, 2
        %v276 = vadd.f32 %v274, %v275
        %v277 = vrot.slane %v276, 1
        %v278 = vadd.f32 %v276, %v277
        %v279 = vrot.slane %v250, 4
        %v280 = vadd.f32 %v250, %v279
        %v281 = vrot.slane %v280, 2
        %v282 = vadd.f32 %v280, %v281
        %v283 = vrot.slane %v282, 1
        %v284 = vadd.f32 %v282, %v283
        %v285 = vrot.slane %v251, 4
        %v286 = vadd.f32 %v251, %v285
        %v287 = vrot.slane %v286, 2
        %v288 = vadd.f32 %v286, %v287
        %v289 = vrot.slane %v288, 1
        %v290 = vadd.f32 %v288, %v289
        %v291 = vrot.slane %v252, 4
        %v292 = vadd.f32 %v252, %v291
        %v293 = vrot.slane %v292, 2
        %v294 = vadd.f32 %v292, %v293
        %v295 = vrot.slane %v294, 1
        %v296 = vadd.f32 %v294, %v295
        %v297 = vrot.slane %v253, 4
        %v298 = vadd.f32 %v253, %v297
        %v299 = vrot.slane %v298, 2
        %v300 = vadd.f32 %v298, %v299
        %v301 = vrot.slane %v300, 1
        %v302 = vadd.f32 %v300, %v301
        %v311 = vcombine.low %v260, %v266
        %v312 = vcombine.low %v272, %v278
        %v313 = vcombine.low %v284, %v290
        %v314 = vcombine.low %v296, %v302
        %v316 = vunpack.c.l.s4 1966171168
        %v317 = vunpack.c.0.s8 %v316
        %v318 = vlaneseq
        %v319 = vshrl.u32 %v318, 7
        %v320 = vsub.s32 %v317, %v319
        %v321 = vrot.slane %v311, %v320
        %v323 = vunpack.c.l.s4 1966171168
        %v324 = vunpack.c.0.s8 %v323
        %v325 = vlaneseq
        %v326 = vshrl.u32 %v325, 7
        %v327 = vsub.s32 %v324, %v326
        %v328 = vrot.slane %v312, %v327
        %v330 = vunpack.c.l.s4 1966171168
        %v331 = vunpack.c.0.s8 %v330
        %v332 = vlaneseq
        %v333 = vshrl.u32 %v332, 7
        %v334 = vsub.s32 %v331, %v333
        %v335 = vrot.slane %v313, %v334
        %v337 = vunpack.c.l.s4 1966171168
        %v338 = vunpack.c.0.s8 %v337
        %v339 = vlaneseq
        %v340 = vshrl.u32 %v339, 7
        %v341 = vsub.s32 %v338, %v340
        %v342 = vrot.slane %v314, %v341
        %v343 = vcombine.low %v321, %v328
        %v344 = vcombine.low %v335, %v342
        %v346 = vunpack.c.l.s4 1966171168
        %v347 = vunpack.c.0.s8 %v346
        %v348 = vlaneseq
        %v349 = vshrl.u32 %v348, 7
        %v350 = vsub.s32 %v347, %v349
        %v351 = vrot.slane %v343, %v350
        %v353 = vunpack.c.l.s4 1966171168
        %v354 = vunpack.c.0.s8 %v353
        %v355 = vlaneseq
        %v356 = vshrl.u32 %v355, 7
        %v357 = vsub.s32 %v354, %v356
        %v358 = vrot.slane %v344, %v357
        %v359 = vcombine.low %v351, %v358
        %v361 = vadd.f32 %v254, %v359
        %362 = vst [vmem:[#allocation2] sm:$0xff] %v361
        // Predicated region
        $region41: #{tpu_custom_call.1} parent=27 // pred_check
          %p363 = pneg %p217
        $region42: #{tpu_custom_call.1} parent=27 // pred_check_branch
          %365 = sbr.rel (%p363) target = $region44
        $region43: #{tpu_custom_call.1} parent=27 // pred_region
          %v366 = vld [vmem:[#allocation2] sm:$0xff]
          %v368 = vlaneseq
          %v369 = vshrl.u32 %v368, 7
          %v370 = vsub.s32 0, %v369
          %v371 = vrot.slane %v366, %v370
          %v372 = vlaneseq
          %v373 = vshrl.u32 %v372, 7
          %v374 = vsub.s32 1, %v373
          %v375 = vrot.slane %v366, %v374
          %v376 = vlaneseq
          %v377 = vshrl.u32 %v376, 7
          %v378 = vsub.s32 2, %v377
          %v379 = vrot.slane %v366, %v378
          %v380 = vlaneseq
          %v381 = vshrl.u32 %v380, 7
          %v382 = vsub.s32 3, %v381
          %v383 = vrot.slane %v366, %v382
          %v384 = vlaneseq
          %v385 = vshrl.u32 %v384, 7
          %v386 = vsub.s32 4, %v385
          %v387 = vrot.slane %v366, %v386
          %v388 = vlaneseq
          %v389 = vshrl.u32 %v388, 7
          %v390 = vsub.s32 5, %v389
          %v391 = vrot.slane %v366, %v390
          %v392 = vlaneseq
          %v393 = vshrl.u32 %v392, 7
          %v394 = vsub.s32 6, %v393
          %v395 = vrot.slane %v366, %v394
          %v396 = vlaneseq
          %v397 = vshrl.u32 %v396, 7
          %v398 = vsub.s32 7, %v397
          %v399 = vrot.slane %v366, %v398
          %vm408 = vcmask 1040384
          %v409 = vsel %vm408, %v371, 0.0
          %v410 = vsel %vm408, %v375, 0.0
          %v411 = vadd.f32 %v409, %v410
          %v412 = vsel %vm408, %v379, 0.0
          %v413 = vadd.f32 %v411, %v412
          %v414 = vsel %vm408, %v383, 0.0
          %v415 = vadd.f32 %v413, %v414
          %v416 = vsel %vm408, %v387, 0.0
          %v417 = vadd.f32 %v415, %v416
          %v418 = vsel %vm408, %v391, 0.0
          %v419 = vadd.f32 %v417, %v418
          %v420 = vsel %vm408, %v395, 0.0
          %v421 = vadd.f32 %v419, %v420
          %v422 = vsel %vm408, %v399, 0.0
          %v423 = vadd.f32 %v421, %v422
          %424 = vadd.xlane.f32.xlu0 %v423
          %v425 = vpop.xlane.xlu0 %424
          %v426 = vrot.slane %v425, 4
          %v427 = vadd.f32 %v425, %v426
          %v428 = vrot.slane %v427, 2
          %v429 = vadd.f32 %v427, %v428
          %v430 = vrot.slane %v429, 1
          %v431 = vadd.f32 %v429, %v430
          %s432 = vtos %v431
          %v433 = vstv %s432
          %434 = vst [vmem:[%s214] sm:$0x1] %v433
        $region44: #{tpu_custom_call.1} parent=27 // pred_fallthru
          _
        %s435 = sand.u32 %s98, 1
        %s436 = scalar_lea.sflag [#allocation5], %s435
        %s437 = sand.u32 %s98, 1
        %s438 = scalar_lea.vmem [#allocation8], %s437
        // Predicated region
        $region45: #{tpu_custom_call.1} parent=27 // pred_check
          %p439 = pneg %p108
        $region46: #{tpu_custom_call.1} parent=27 // pred_check_branch
          %441 = sbr.rel (%p439) target = $region48
        $region47: #{tpu_custom_call.1} parent=27 // pred_region
          %s443 = ssub.s32 16, 16
          %444 = vsyncadd %s436, %s443
          %s445 = smul.addr %s26, 16
          %s446 = scalar_lea.hbm %s2, %s445
          %s448 = sshll.u32 %s438, 4
          %s449 = int_to_ptr.vmem [resolvable:$true] %s448
          %451 = dma.vmem_to_hbm [thread:$0]  %s449, 16, %s446, %s436
        $region48: #{tpu_custom_call.1} parent=27 // pred_fallthru
          _
      $region28: #{tpu_custom_call.1} parent=5 // pred_fallthru
        _
      %p452 = scmp.le.s32.totalorder 2, %s17
      // Predicated region
      $region49: #{tpu_custom_call.1} parent=5 // pred_check
        %p453 = pneg %p452
      $region50: #{tpu_custom_call.1} parent=5 // pred_check_branch
        %455 = sbr.rel (%p453) target = $region52
      $region51: #{tpu_custom_call.1} parent=5 // pred_region
        %s456 = ssub.s32 %s17, 2
        // Predicated region
        $region53: #{tpu_custom_call.1} parent=51 // pred_check
          %p457 = pneg %p114
        $region54: #{tpu_custom_call.1} parent=51 // pred_check_branch
          %459 = sbr.rel (%p457) target = $region56
        $region55: #{tpu_custom_call.1} parent=51 // pred_region
          %s460 = sand.u32 %s99, 1
          %s461 = scalar_lea.sflag [#allocation5], %s460
          %s462 = sand.u32 %s99, 1
          %s463 = scalar_lea.vmem [#allocation8], %s462
          %464 = dma.done %s461, 16
        $region56: #{tpu_custom_call.1} parent=51 // pred_fallthru
          _
      $region52: #{tpu_custom_call.1} parent=5 // pred_fallthru
        _
    $region6: #{tpu_custom_call.1} parent=1 // loop_footer
      %s21 = sadd.s32 1, %s17
    $region7: #{tpu_custom_call.1} parent=1 // loop_footer_branch
      %16 = sbr.rel target = $region3
    $region8: #{tpu_custom_call.1} parent=1 // loop_exit
      _
    %465 = vsyncpa [#allocation4], 1
    %s466 = scalar_lea.sflag [#allocation4], 1
    %467 = vsyncpa %s466, 1
    %468 = vsyncpa [#allocation7], 1
    %s469 = scalar_lea.sflag [#allocation7], 1
    %470 = vsyncpa %s469, 1
    %471 = vsyncpa [#allocation5], 1
    %s472 = scalar_lea.sflag [#allocation5], 1
    %473 = vsyncpa %s472, 1

</llo_original>
